<compile_context>
chip_gen: v5e
topology: v5e:2x2
jax: 0.10.0
libtpu: 0.0.40
codegen_flags: <defaults>
</compile_context>

<pallas_src>
import functools

import jax
import jax.numpy as jnp
from jax.experimental import pallas as pl
from jax.experimental.pallas import tpu as pltpu


def _round_up(x, m):
    return ((x + m - 1) // m) * m


# ----------------------------------------------------------------------------
# Kernel 1: ConvWordsEncoder hot path for a block of TN sequences
#   (im2col staging -> one MXU matmul -> bias -> masked max-pool -> ReLU)
# ----------------------------------------------------------------------------
def _encoder_kernel(len_ref, x_ref, w_ref, b_ref, o_ref, col_ref, *, K, TN, L_pad):
    # len_ref: (N_pad,) int32 in SMEM  -- per-row count of valid conv outputs
    # x_ref:   (TN*L_pad, E)           -- flat, zero-padded embedded activations
    # w_ref:   (KE_pad, C)             -- conv weight, taps stacked, zero-padded to 128
    # b_ref:   (1, C) f32              -- conv bias
    # o_ref:   (TN, C) f32             -- encoded sentence vectors for this block
    # col_ref: (TN*L_pad, KE_pad)      -- im2col VMEM scratch
    M, E = x_ref.shape
    P = M - (K - 1)                    # rows whose K-tap window stays inside the block
    row0 = pl.program_id(0) * TN

    # Stage the K shifted copies side by side: col[p, k*E:(k+1)*E] = x[p + k].
    # Zero first so the K*E..KE_pad pad lanes and the K-1 tail rows contribute nothing.
    col_ref[...] = jnp.zeros_like(col_ref)
    for k in range(K):                 # static unroll over conv taps
        col_ref[0:P, k * E:(k + 1) * E] = x_ref[k:k + P, :]

    # One MXU push for the whole conv of TN sequences, f32 accumulation.
    acc = jnp.dot(col_ref[...], w_ref[...], preferred_element_type=jnp.float32)
    acc = acc + b_ref[...]                                    # (M, C) + (1, C)

    # Masked max-pool over time + ReLU; each row is a tile-aligned (L_pad, C) segment.
    pos = jax.lax.broadcasted_iota(jnp.int32, (L_pad, 1), 0)  # hoisted out of the loop
    for r in range(TN):
        seg = acc[r * L_pad:(r + 1) * L_pad, :]               # (L_pad, C)
        valid = pos < len_ref[row0 + r]                       # SMEM scalar read
        pooled = jnp.max(jnp.where(valid, seg, -jnp.inf), axis=0, keepdims=True)
        o_ref[r:r + 1, :] = jnp.maximum(pooled, 0.0)


def conv_words_encoder(tokens, lengths, emb_table, conv_w, conv_b, *,
                       tn=8, compute_dtype=jnp.float32):
    """Encode N token rows -> (N, C) sentence vectors.

    tokens:  (N, L_in) int32, 0 = padding_idx
    lengths: (N,) int32, original (pre-common-padding) sequence length per row
    conv_w:  (C, E, K)  PyTorch Conv1d weight layout
    conv_b:  (C,)
    """
    N, L_in = tokens.shape
    C, E, K = conv_w.shape
    pad = K // 2

    L_pad = _round_up(L_in + 2 * pad, 8)       # flat per-row stride (sublane aligned)
    N_pad = _round_up(N, tn)
    KE = K * E
    KE_pad = _round_up(KE, 128)                # 128-aligned contraction dim
    M = tn * L_pad

    # --- host-side glue (XLA): gather embeddings + lay activations out flat ---
    # TODO(synk): for a production-size vocabulary, fuse this gather into the kernel
    # (scalar-prefetch-driven DMA gather) instead of an HBM (N_pad*L_pad, E) intermediate.
    tok = jnp.pad(tokens, ((0, N_pad - N), (0, 0)))
    x = jnp.take(emb_table, tok, axis=0).astype(compute_dtype)        # (N_pad, L_in, E)
    x = jnp.pad(x, ((0, 0), (pad, L_pad - L_in - pad), (0, 0)))       # (N_pad, L_pad, E)
    x_flat = x.reshape(N_pad * L_pad, E)

    # conv weight (C, E, K) -> (K*E, C), taps stacked along the contraction dim.
    w_flat = jnp.transpose(conv_w, (2, 1, 0)).reshape(KE, C)
    w_flat = jnp.pad(w_flat, ((0, KE_pad - KE), (0, 0))).astype(compute_dtype)
    bias = conv_b.reshape(1, C).astype(jnp.float32)

    # Per-row number of valid conv output positions (= the pool width in the original).
    out_len = lengths.astype(jnp.int32) + (2 * pad - (K - 1))
    out_len = jnp.pad(out_len, (0, N_pad - N))

    kernel = functools.partial(_encoder_kernel, K=K, TN=tn, L_pad=L_pad)
    out = pl.pallas_call(
        kernel,
        out_shape=jax.ShapeDtypeStruct((N_pad, C), jnp.float32),
        grid_spec=pltpu.PrefetchScalarGridSpec(
            num_scalar_prefetch=1,
            grid=(N_pad // tn,),
            in_specs=[
                pl.BlockSpec((M, E), lambda i, lens: (i, 0)),
                pl.BlockSpec((KE_pad, C), lambda i, lens: (0, 0)),   # weight stays resident
                pl.BlockSpec((1, C), lambda i, lens: (0, 0)),
            ],
            out_specs=pl.BlockSpec((tn, C), lambda i, lens: (i, 0)),
            scratch_shapes=[pltpu.VMEM((M, KE_pad), compute_dtype)],
        ),
        compiler_params=pltpu.CompilerParams(
            dimension_semantics=("parallel",)),
    )(out_len, x_flat, w_flat, bias)
    return out[:N]


# ----------------------------------------------------------------------------
# Kernel 2: batched matrix-vector cosine similarity (all B rows in one step)
# ----------------------------------------------------------------------------
def _cosine_kernel(e_ref, q_ref, o_ref):
    # e_ref: (B, G, C), q_ref: (B, 1, C), o_ref: (B, G)
    e = e_ref[...].astype(jnp.float32)
    q = q_ref[...].astype(jnp.float32)
    dots = jnp.sum(e * q, axis=-1)                            # (B, G) XLU reduce
    e_nrm = jnp.sqrt(jnp.sum(e * e, axis=-1))                 # (B, G)
    q_nrm = jnp.sqrt(jnp.sum(q * q, axis=-1))                 # (B, 1)
    denom = jnp.maximum(e_nrm, 1e-12) * jnp.maximum(q_nrm, 1e-12)
    o_ref[...] = dots * pl.reciprocal(denom, approx=False)    # EUP reciprocal


def batchmv_cosine_similarity(edge_vectors, question_vectors):
    """edge_vectors: (B, G, C), question_vectors: (B, C) -> (B, G)."""
    B, G, C = edge_vectors.shape
    q3 = question_vectors.reshape(B, 1, C)
    return pl.pallas_call(
        _cosine_kernel,
        out_shape=jax.ShapeDtypeStruct((B, G), jnp.float32),
        grid=(1,),                                            # single step over all B
        in_specs=[
            pl.BlockSpec((B, G, C), lambda i: (0, 0, 0)),
            pl.BlockSpec((B, 1, C), lambda i: (0, 0, 0)),
        ],
        out_specs=pl.BlockSpec((B, G), lambda i: (0, 0)),
    )(edge_vectors, q3)


# ----------------------------------------------------------------------------
# OneEdgeModel.forward
# ----------------------------------------------------------------------------
@functools.partial(jax.jit, static_argnames=("tn", "compute_dtype"))
def one_edge_model_forward(questions_m, graphs_m, emb_table, conv_w, conv_b,
                           *, tn=8, compute_dtype=jnp.float32):
    # padding_idx=0: the embedding row 0 is identically zero in the PyTorch module.
    emb_table = emb_table.at[0].set(0.0)

    B, L_q = questions_m.shape
    _, G, L_g = graphs_m.shape
    L_in = max(L_q, L_g)

    # Merge question + edge rows into ONE encoder call (single launch, weights stay
    # resident); per-row original lengths keep the max-pool identical to the original.
    q_tok = jnp.pad(questions_m.astype(jnp.int32), ((0, 0), (0, L_in - L_q)))
    g_tok = jnp.pad(graphs_m.reshape(B * G, L_g).astype(jnp.int32),
                    ((0, 0), (0, L_in - L_g)))
    tokens = jnp.concatenate([q_tok, g_tok], axis=0)                   # (B+B*G, L_in)
    lengths = jnp.concatenate([jnp.full((B,), L_q, jnp.int32),
                               jnp.full((B * G,), L_g, jnp.int32)])

    enc = conv_words_encoder(tokens, lengths, emb_table, conv_w, conv_b,
                             tn=tn, compute_dtype=compute_dtype)       # (B+B*G, C)
    question_vec = enc[:B]                                             # (B, C)
    edge_vec = enc[B:].reshape(B, G, -1)                               # (B, G, C)
    return batchmv_cosine_similarity(edge_vec, question_vec)           # (B, G)


# ----------------------------------------------------------------------------
# Pure-JAX reference (for a correctness check against the Pallas path)
# ----------------------------------------------------------------------------
def _encoder_ref(tokens, emb_table, conv_w, conv_b):
    C, E, K = conv_w.shape
    pad = K // 2
    emb = emb_table.at[0].set(0.0)
    x = jnp.take(emb, tokens, axis=0)                                  # (N, L, E)
    L = tokens.shape[1]
    xp = jnp.pad(x, ((0, 0), (pad, pad), (0, 0)))
    L_out = L + 2 * pad - (K - 1)
    conv = sum(jnp.einsum("nle,ce->nlc", xp[:, k:k + L_out, :], conv_w[:, :, k],
                          precision=jax.lax.Precision.HIGHEST)
               for k in range(K)) + conv_b
    return jnp.maximum(jnp.max(conv, axis=1), 0.0)


def _forward_ref(questions_m, graphs_m, emb_table, conv_w, conv_b):
    q = _encoder_ref(questions_m, emb_table, conv_w, conv_b)
    B, G, Lg = graphs_m.shape
    e = _encoder_ref(graphs_m.reshape(B * G, Lg), emb_table, conv_w, conv_b)
    e = e.reshape(B, G, -1)
    en = e / jnp.maximum(jnp.linalg.norm(e, axis=-1, keepdims=True), 1e-12)
    qn = q / jnp.maximum(jnp.linalg.norm(q, axis=-1, keepdims=True), 1e-12)
    return jnp.sum(en * qn[:, None, :], axis=-1)


if __name__ == "__main__":
    # Small shapes consistent with the module's forward.
    B, G = 2, 4                  # batch, edges per graph
    L_q, L_g = 12, 8             # question / edge-label token lengths
    V, E, C, K = 50, 32, 32, 3   # vocab, word-emb size, conv channels, conv width

    key = jax.random.PRNGKey(0)
    k_emb, k_w, k_b, k_q, k_g = jax.random.split(key, 5)

    # Deterministic synthetic parameters (PyTorch layouts). Rounded to bf16-representable
    # f32 so MXU input-precision modes cannot affect the kernel-vs-reference comparison.
    emb_table = (0.1 * jax.random.normal(k_emb, (V, E), jnp.float32)
                 ).astype(jnp.bfloat16).astype(jnp.float32)
    emb_table = emb_table.at[0].set(0.0)                       # padding_idx=0
    conv_w = (0.1 * jax.random.normal(k_w, (C, E, K), jnp.float32)
              ).astype(jnp.bfloat16).astype(jnp.float32)       # Conv1d (C_out, C_in, K)
    conv_b = 0.05 * jax.random.normal(k_b, (C,), jnp.float32)

    questions_m = jax.random.randint(k_q, (B, L_q), 1, V, jnp.int32)
    graphs_m = jax.random.randint(k_g, (B, G, L_g), 1, V, jnp.int32)

    preds = one_edge_model_forward(questions_m, graphs_m, emb_table, conv_w, conv_b)
    preds = jax.block_until_ready(preds)

    ref = _forward_ref(questions_m, graphs_m, emb_table, conv_w, conv_b)
    assert preds.shape == (B, G)
    assert jnp.allclose(preds, ref, atol=1e-4, rtol=1e-4), (preds, ref)

    print("KERNEL_OK")
</pallas_src>

<mosaic_0001>
module attributes {stable_mosaic.version = 11 : i64} {
  func.func @_encoder_kernel(%arg0: i32, %arg1: memref<16xi32, #tpu.memory_space<smem>>, %arg2: memref<128x32xf32, #tpu.memory_space<vmem>>, %arg3: memref<128x32xf32, #tpu.memory_space<vmem>>, %arg4: memref<1x32xf32, #tpu.memory_space<vmem>>, %arg5: memref<8x32xf32, #tpu.memory_space<vmem>>, %arg6: memref<128x128xf32, #tpu.memory_space<vmem>>) attributes {dimension_semantics = [#tpu.dimension_semantics<parallel>], iteration_bounds = array<i64: 2>, scalar_prefetch = 1 : i64, scratch_operands = 1 : i64, tpu.core_type = #tpu.core_type<tc>, window_params = [{transform_indices = @transform_0, window_bounds = array<i64: 128, 32>}, {pipeline_mode = #tpu.pipeline_mode<synchronous>, transform_indices = @transform_1, window_bounds = array<i64: 128, 32>}, {pipeline_mode = #tpu.pipeline_mode<synchronous>, transform_indices = @transform_2, window_bounds = array<i64: 1, 32>}, {transform_indices = @transform_3, window_bounds = array<i64: 8, 32>}]} {
    %c8_i32 = arith.constant 8 : i32
    %0 = arith.muli %arg0, %c8_i32 : i32
    %cst = arith.constant 0.000000e+00 : f32
    %1 = vector.broadcast %cst : f32 to vector<128x128xf32>
    %c0 = arith.constant 0 : index
    %c0_0 = arith.constant 0 : index
    %2 = vector.load %arg6[%c0, %c0_0] : memref<128x128xf32, #tpu.memory_space<vmem>>, vector<128x128xf32>
    tpu.vector_store %arg6[%c0, %c0_0], %1 {strides = array<i32>} : memref<128x128xf32, #tpu.memory_space<vmem>>, vector<128x128xf32>,
    %c0_1 = arith.constant 0 : index
    %c0_2 = arith.constant 0 : index
    %3 = vector.load %arg2[%c0_1, %c0_2] : memref<128x32xf32, #tpu.memory_space<vmem>>, vector<126x32xf32>
    %c0_3 = arith.constant 0 : index
    %c0_4 = arith.constant 0 : index
    %4 = vector.load %arg6[%c0_3, %c0_4] : memref<128x128xf32, #tpu.memory_space<vmem>>, vector<126x32xf32>
    tpu.vector_store %arg6[%c0_3, %c0_4], %3 {strides = array<i32>} : memref<128x128xf32, #tpu.memory_space<vmem>>, vector<126x32xf32>,
    %c1 = arith.constant 1 : index
    %c0_5 = arith.constant 0 : index
    %5 = vector.load %arg2[%c1, %c0_5] : memref<128x32xf32, #tpu.memory_space<vmem>>, vector<126x32xf32>
    %c0_6 = arith.constant 0 : index
    %c32 = arith.constant 32 : index
    %6 = vector.load %arg6[%c0_6, %c32] : memref<128x128xf32, #tpu.memory_space<vmem>>, vector<126x32xf32>
    tpu.vector_store %arg6[%c0_6, %c32], %5 {strides = array<i32>} : memref<128x128xf32, #tpu.memory_space<vmem>>, vector<126x32xf32>,
    %c2 = arith.constant 2 : index
    %c0_7 = arith.constant 0 : index
    %7 = vector.load %arg2[%c2, %c0_7] : memref<128x32xf32, #tpu.memory_space<vmem>>, vector<126x32xf32>
    %c0_8 = arith.constant 0 : index
    %c64 = arith.constant 64 : index
    %8 = vector.load %arg6[%c0_8, %c64] : memref<128x128xf32, #tpu.memory_space<vmem>>, vector<126x32xf32>
    tpu.vector_store %arg6[%c0_8, %c64], %7 {strides = array<i32>} : memref<128x128xf32, #tpu.memory_space<vmem>>, vector<126x32xf32>,
    %c0_9 = arith.constant 0 : index
    %c0_10 = arith.constant 0 : index
    %9 = vector.load %arg6[%c0_9, %c0_10] : memref<128x128xf32, #tpu.memory_space<vmem>>, vector<128x128xf32>
    %c0_11 = arith.constant 0 : index
    %c0_12 = arith.constant 0 : index
    %10 = vector.load %arg3[%c0_11, %c0_12] : memref<128x32xf32, #tpu.memory_space<vmem>>, vector<128x32xf32>
    %cst_13 = arith.constant dense<0.000000e+00> : vector<128x32xf32>
    %11 = tpu.matmul %9, %10, %cst_13 {dimension_numbers = #tpu.dot_dimension_numbers<[1], [0], [0], [1], [0, 0, 1, 1], [], []>} : vector<128x128xf32>, vector<128x32xf32>, vector<128x32xf32> -> vector<128x32xf32>
    %c0_14 = arith.constant 0 : index
    %c0_15 = arith.constant 0 : index
    %12 = vector.load %arg4[%c0_14, %c0_15] : memref<1x32xf32, #tpu.memory_space<vmem>>, vector<1x32xf32>
    %13 = vector.broadcast %12 : vector<1x32xf32> to vector<128x32xf32>
    %14 = arith.addf %11, %13 : vector<128x32xf32>
    %15 = tpu.iota {dimensions = array<i32: 0>} : vector<16x1xi32>
    %16 = vector.extract_strided_slice %14 {offsets = [0, 0], sizes = [16, 32], strides = [1, 1]} : vector<128x32xf32> to vector<16x32xf32>
    %c0_i32 = arith.constant 0 : i32
    %17 = arith.addi %0, %c0_i32 : i32
    %18 = arith.index_cast %17 : i32 to index
    %19 = memref.load %arg1[%18] : memref<16xi32, #tpu.memory_space<smem>>
    %20 = vector.broadcast %19 : i32 to vector<16x1xi32>
    %21 = arith.cmpi slt, %15, %20 : vector<16x1xi32>
    %cst_16 = arith.constant 0xFF800000 : f32
    %22 = vector.shape_cast %21 : vector<16x1xi1> to vector<16x1xi1>
    %23 = vector.broadcast %22 : vector<16x1xi1> to vector<16x32xi1>
    %24 = vector.broadcast %cst_16 : f32 to vector<16x32xf32>
    %25 = arith.select %23, %16, %24 : vector<16x32xi1>, vector<16x32xf32>
    %cst_17 = arith.constant dense<0xFF800000> : vector<32xf32>
    %26 = vector.multi_reduction <maximumf>, %25, %cst_17 [0] : vector<16x32xf32> to vector<32xf32>
    %27 = vector.shape_cast %26 : vector<32xf32> to vector<1x32xf32>
    %cst_18 = arith.constant 0.000000e+00 : f32
    %28 = vector.broadcast %cst_18 : f32 to vector<1x32xf32>
    %29 = arith.maximumf %27, %28 : vector<1x32xf32>
    %c0_19 = arith.constant 0 : index
    %c0_20 = arith.constant 0 : index
    %30 = vector.load %arg5[%c0_19, %c0_20] : memref<8x32xf32, #tpu.memory_space<vmem>>, vector<1x32xf32>
    tpu.vector_store %arg5[%c0_19, %c0_20], %29 {strides = array<i32>} : memref<8x32xf32, #tpu.memory_space<vmem>>, vector<1x32xf32>,
    %31 = vector.extract_strided_slice %14 {offsets = [16, 0], sizes = [16, 32], strides = [1, 1]} : vector<128x32xf32> to vector<16x32xf32>
    %c1_i32 = arith.constant 1 : i32
    %32 = arith.addi %0, %c1_i32 : i32
    %33 = arith.index_cast %32 : i32 to index
    %34 = memref.load %arg1[%33] : memref<16xi32, #tpu.memory_space<smem>>
    %35 = vector.broadcast %34 : i32 to vector<16x1xi32>
    %36 = arith.cmpi slt, %15, %35 : vector<16x1xi32>
    %cst_21 = arith.constant 0xFF800000 : f32
    %37 = vector.shape_cast %36 : vector<16x1xi1> to vector<16x1xi1>
    %38 = vector.broadcast %37 : vector<16x1xi1> to vector<16x32xi1>
    %39 = vector.broadcast %cst_21 : f32 to vector<16x32xf32>
    %40 = arith.select %38, %31, %39 : vector<16x32xi1>, vector<16x32xf32>
    %cst_22 = arith.constant dense<0xFF800000> : vector<32xf32>
    %41 = vector.multi_reduction <maximumf>, %40, %cst_22 [0] : vector<16x32xf32> to vector<32xf32>
    %42 = vector.shape_cast %41 : vector<32xf32> to vector<1x32xf32>
    %cst_23 = arith.constant 0.000000e+00 : f32
    %43 = vector.broadcast %cst_23 : f32 to vector<1x32xf32>
    %44 = arith.maximumf %42, %43 : vector<1x32xf32>
    %c1_24 = arith.constant 1 : index
    %c0_25 = arith.constant 0 : index
    %45 = vector.load %arg5[%c1_24, %c0_25] : memref<8x32xf32, #tpu.memory_space<vmem>>, vector<1x32xf32>
    tpu.vector_store %arg5[%c1_24, %c0_25], %44 {strides = array<i32>} : memref<8x32xf32, #tpu.memory_space<vmem>>, vector<1x32xf32>,
    %46 = vector.extract_strided_slice %14 {offsets = [32, 0], sizes = [16, 32], strides = [1, 1]} : vector<128x32xf32> to vector<16x32xf32>
    %c2_i32 = arith.constant 2 : i32
    %47 = arith.addi %0, %c2_i32 : i32
    %48 = arith.index_cast %47 : i32 to index
    %49 = memref.load %arg1[%48] : memref<16xi32, #tpu.memory_space<smem>>
    %50 = vector.broadcast %49 : i32 to vector<16x1xi32>
    %51 = arith.cmpi slt, %15, %50 : vector<16x1xi32>
    %cst_26 = arith.constant 0xFF800000 : f32
    %52 = vector.shape_cast %51 : vector<16x1xi1> to vector<16x1xi1>
    %53 = vector.broadcast %52 : vector<16x1xi1> to vector<16x32xi1>
    %54 = vector.broadcast %cst_26 : f32 to vector<16x32xf32>
    %55 = arith.select %53, %46, %54 : vector<16x32xi1>, vector<16x32xf32>
    %cst_27 = arith.constant dense<0xFF800000> : vector<32xf32>
    %56 = vector.multi_reduction <maximumf>, %55, %cst_27 [0] : vector<16x32xf32> to vector<32xf32>
    %57 = vector.shape_cast %56 : vector<32xf32> to vector<1x32xf32>
    %cst_28 = arith.constant 0.000000e+00 : f32
    %58 = vector.broadcast %cst_28 : f32 to vector<1x32xf32>
    %59 = arith.maximumf %57, %58 : vector<1x32xf32>
    %c2_29 = arith.constant 2 : index
    %c0_30 = arith.constant 0 : index
    %60 = vector.load %arg5[%c2_29, %c0_30] : memref<8x32xf32, #tpu.memory_space<vmem>>, vector<1x32xf32>
    tpu.vector_store %arg5[%c2_29, %c0_30], %59 {strides = array<i32>} : memref<8x32xf32, #tpu.memory_space<vmem>>, vector<1x32xf32>,
    %61 = vector.extract_strided_slice %14 {offsets = [48, 0], sizes = [16, 32], strides = [1, 1]} : vector<128x32xf32> to vector<16x32xf32>
    %c3_i32 = arith.constant 3 : i32
    %62 = arith.addi %0, %c3_i32 : i32
    %63 = arith.index_cast %62 : i32 to index
    %64 = memref.load %arg1[%63] : memref<16xi32, #tpu.memory_space<smem>>
    %65 = vector.broadcast %64 : i32 to vector<16x1xi32>
    %66 = arith.cmpi slt, %15, %65 : vector<16x1xi32>
    %cst_31 = arith.constant 0xFF800000 : f32
    %67 = vector.shape_cast %66 : vector<16x1xi1> to vector<16x1xi1>
    %68 = vector.broadcast %67 : vector<16x1xi1> to vector<16x32xi1>
    %69 = vector.broadcast %cst_31 : f32 to vector<16x32xf32>
    %70 = arith.select %68, %61, %69 : vector<16x32xi1>, vector<16x32xf32>
    %cst_32 = arith.constant dense<0xFF800000> : vector<32xf32>
    %71 = vector.multi_reduction <maximumf>, %70, %cst_32 [0] : vector<16x32xf32> to vector<32xf32>
    %72 = vector.shape_cast %71 : vector<32xf32> to vector<1x32xf32>
    %cst_33 = arith.constant 0.000000e+00 : f32
    %73 = vector.broadcast %cst_33 : f32 to vector<1x32xf32>
    %74 = arith.maximumf %72, %73 : vector<1x32xf32>
    %c3 = arith.constant 3 : index
    %c0_34 = arith.constant 0 : index
    %75 = vector.load %arg5[%c3, %c0_34] : memref<8x32xf32, #tpu.memory_space<vmem>>, vector<1x32xf32>
    tpu.vector_store %arg5[%c3, %c0_34], %74 {strides = array<i32>} : memref<8x32xf32, #tpu.memory_space<vmem>>, vector<1x32xf32>,
    %76 = vector.extract_strided_slice %14 {offsets = [64, 0], sizes = [16, 32], strides = [1, 1]} : vector<128x32xf32> to vector<16x32xf32>
    %c4_i32 = arith.constant 4 : i32
    %77 = arith.addi %0, %c4_i32 : i32
    %78 = arith.index_cast %77 : i32 to index
    %79 = memref.load %arg1[%78] : memref<16xi32, #tpu.memory_space<smem>>
    %80 = vector.broadcast %79 : i32 to vector<16x1xi32>
    %81 = arith.cmpi slt, %15, %80 : vector<16x1xi32>
    %cst_35 = arith.constant 0xFF800000 : f32
    %82 = vector.shape_cast %81 : vector<16x1xi1> to vector<16x1xi1>
    %83 = vector.broadcast %82 : vector<16x1xi1> to vector<16x32xi1>
    %84 = vector.broadcast %cst_35 : f32 to vector<16x32xf32>
    %85 = arith.select %83, %76, %84 : vector<16x32xi1>, vector<16x32xf32>
    %cst_36 = arith.constant dense<0xFF800000> : vector<32xf32>
    %86 = vector.multi_reduction <maximumf>, %85, %cst_36 [0] : vector<16x32xf32> to vector<32xf32>
    %87 = vector.shape_cast %86 : vector<32xf32> to vector<1x32xf32>
    %cst_37 = arith.constant 0.000000e+00 : f32
    %88 = vector.broadcast %cst_37 : f32 to vector<1x32xf32>
    %89 = arith.maximumf %87, %88 : vector<1x32xf32>
    %c4 = arith.constant 4 : index
    %c0_38 = arith.constant 0 : index
    %90 = vector.load %arg5[%c4, %c0_38] : memref<8x32xf32, #tpu.memory_space<vmem>>, vector<1x32xf32>
    tpu.vector_store %arg5[%c4, %c0_38], %89 {strides = array<i32>} : memref<8x32xf32, #tpu.memory_space<vmem>>, vector<1x32xf32>,
    %91 = vector.extract_strided_slice %14 {offsets = [80, 0], sizes = [16, 32], strides = [1, 1]} : vector<128x32xf32> to vector<16x32xf32>
    %c5_i32 = arith.constant 5 : i32
    %92 = arith.addi %0, %c5_i32 : i32
    %93 = arith.index_cast %92 : i32 to index
    %94 = memref.load %arg1[%93] : memref<16xi32, #tpu.memory_space<smem>>
    %95 = vector.broadcast %94 : i32 to vector<16x1xi32>
    %96 = arith.cmpi slt, %15, %95 : vector<16x1xi32>
    %cst_39 = arith.constant 0xFF800000 : f32
    %97 = vector.shape_cast %96 : vector<16x1xi1> to vector<16x1xi1>
    %98 = vector.broadcast %97 : vector<16x1xi1> to vector<16x32xi1>
    %99 = vector.broadcast %cst_39 : f32 to vector<16x32xf32>
    %100 = arith.select %98, %91, %99 : vector<16x32xi1>, vector<16x32xf32>
    %cst_40 = arith.constant dense<0xFF800000> : vector<32xf32>
    %101 = vector.multi_reduction <maximumf>, %100, %cst_40 [0] : vector<16x32xf32> to vector<32xf32>
    %102 = vector.shape_cast %101 : vector<32xf32> to vector<1x32xf32>
    %cst_41 = arith.constant 0.000000e+00 : f32
    %103 = vector.broadcast %cst_41 : f32 to vector<1x32xf32>
    %104 = arith.maximumf %102, %103 : vector<1x32xf32>
    %c5 = arith.constant 5 : index
    %c0_42 = arith.constant 0 : index
    %105 = vector.load %arg5[%c5, %c0_42] : memref<8x32xf32, #tpu.memory_space<vmem>>, vector<1x32xf32>
    tpu.vector_store %arg5[%c5, %c0_42], %104 {strides = array<i32>} : memref<8x32xf32, #tpu.memory_space<vmem>>, vector<1x32xf32>,
    %106 = vector.extract_strided_slice %14 {offsets = [96, 0], sizes = [16, 32], strides = [1, 1]} : vector<128x32xf32> to vector<16x32xf32>
    %c6_i32 = arith.constant 6 : i32
    %107 = arith.addi %0, %c6_i32 : i32
    %108 = arith.index_cast %107 : i32 to index
    %109 = memref.load %arg1[%108] : memref<16xi32, #tpu.memory_space<smem>>
    %110 = vector.broadcast %109 : i32 to vector<16x1xi32>
    %111 = arith.cmpi slt, %15, %110 : vector<16x1xi32>
    %cst_43 = arith.constant 0xFF800000 : f32
    %112 = vector.shape_cast %111 : vector<16x1xi1> to vector<16x1xi1>
    %113 = vector.broadcast %112 : vector<16x1xi1> to vector<16x32xi1>
    %114 = vector.broadcast %cst_43 : f32 to vector<16x32xf32>
    %115 = arith.select %113, %106, %114 : vector<16x32xi1>, vector<16x32xf32>
    %cst_44 = arith.constant dense<0xFF800000> : vector<32xf32>
    %116 = vector.multi_reduction <maximumf>, %115, %cst_44 [0] : vector<16x32xf32> to vector<32xf32>
    %117 = vector.shape_cast %116 : vector<32xf32> to vector<1x32xf32>
    %cst_45 = arith.constant 0.000000e+00 : f32
    %118 = vector.broadcast %cst_45 : f32 to vector<1x32xf32>
    %119 = arith.maximumf %117, %118 : vector<1x32xf32>
    %c6 = arith.constant 6 : index
    %c0_46 = arith.constant 0 : index
    %120 = vector.load %arg5[%c6, %c0_46] : memref<8x32xf32, #tpu.memory_space<vmem>>, vector<1x32xf32>
    tpu.vector_store %arg5[%c6, %c0_46], %119 {strides = array<i32>} : memref<8x32xf32, #tpu.memory_space<vmem>>, vector<1x32xf32>,
    %121 = vector.extract_strided_slice %14 {offsets = [112, 0], sizes = [16, 32], strides = [1, 1]} : vector<128x32xf32> to vector<16x32xf32>
    %c7_i32 = arith.constant 7 : i32
    %122 = arith.addi %0, %c7_i32 : i32
    %123 = arith.index_cast %122 : i32 to index
    %124 = memref.load %arg1[%123] : memref<16xi32, #tpu.memory_space<smem>>
    %125 = vector.broadcast %124 : i32 to vector<16x1xi32>
    %126 = arith.cmpi slt, %15, %125 : vector<16x1xi32>
    %cst_47 = arith.constant 0xFF800000 : f32
    %127 = vector.shape_cast %126 : vector<16x1xi1> to vector<16x1xi1>
    %128 = vector.broadcast %127 : vector<16x1xi1> to vector<16x32xi1>
    %129 = vector.broadcast %cst_47 : f32 to vector<16x32xf32>
    %130 = arith.select %128, %121, %129 : vector<16x32xi1>, vector<16x32xf32>
    %cst_48 = arith.constant dense<0xFF800000> : vector<32xf32>
    %131 = vector.multi_reduction <maximumf>, %130, %cst_48 [0] : vector<16x32xf32> to vector<32xf32>
    %132 = vector.shape_cast %131 : vector<32xf32> to vector<1x32xf32>
    %cst_49 = arith.constant 0.000000e+00 : f32
    %133 = vector.broadcast %cst_49 : f32 to vector<1x32xf32>
    %134 = arith.maximumf %132, %133 : vector<1x32xf32>
    %c7 = arith.constant 7 : index
    %c0_50 = arith.constant 0 : index
    %135 = vector.load %arg5[%c7, %c0_50] : memref<8x32xf32, #tpu.memory_space<vmem>>, vector<1x32xf32>
    tpu.vector_store %arg5[%c7, %c0_50], %134 {strides = array<i32>} : memref<8x32xf32, #tpu.memory_space<vmem>>, vector<1x32xf32>,
    return
  }
  func.func @transform_0(%arg0: i32, %arg1: memref<16xi32, #tpu.memory_space<smem>>) -> (i32, i32) {
    %c0_i32 = arith.constant 0 : i32
    %c0_i32_0 = arith.constant 0 : i32
    return %arg0, %c0_i32 : i32, i32
  }
  func.func @transform_1(%arg0: i32, %arg1: memref<16xi32, #tpu.memory_space<smem>>) -> (i32, i32) {
    %c0_i32 = arith.constant 0 : i32
    %c0_i32_0 = arith.constant 0 : i32
    %c0_i32_1 = arith.constant 0 : i32
    return %c0_i32, %c0_i32_0 : i32, i32
  }
  func.func @transform_2(%arg0: i32, %arg1: memref<16xi32, #tpu.memory_space<smem>>) -> (i32, i32) {
    %c0_i32 = arith.constant 0 : i32
    %c0_i32_0 = arith.constant 0 : i32
    %c0_i32_1 = arith.constant 0 : i32
    return %c0_i32, %c0_i32_0 : i32, i32
  }
  func.func @transform_3(%arg0: i32, %arg1: memref<16xi32, #tpu.memory_space<smem>>) -> (i32, i32) {
    %c0_i32 = arith.constant 0 : i32
    %c0_i32_0 = arith.constant 0 : i32
    return %arg0, %c0_i32 : i32, i32
  }
}

module attributes {stable_mosaic.version = 11 : i64} {
  func.func @_cosine_kernel(%arg0: i32, %arg1: memref<2x4x32xf32, #tpu.memory_space<vmem>>, %arg2: memref<2x1x32xf32, #tpu.memory_space<vmem>>, %arg3: memref<2x4xf32, #tpu.memory_space<vmem>>) attributes {dimension_semantics = [#tpu.dimension_semantics<arbitrary>], iteration_bounds = array<i64: 1>, scalar_prefetch = 0 : i64, scratch_operands = 0 : i64, tpu.core_type = #tpu.core_type<tc>, window_params = [{pipeline_mode = #tpu.pipeline_mode<synchronous>, transform_indices = @transform_0, window_bounds = array<i64: 2, 4, 32>}, {pipeline_mode = #tpu.pipeline_mode<synchronous>, transform_indices = @transform_1, window_bounds = array<i64: 2, 1, 32>}, {pipeline_mode = #tpu.pipeline_mode<synchronous>, transform_indices = @transform_2, window_bounds = array<i64: 2, 4>}]} {
    %c0 = arith.constant 0 : index
    %c0_0 = arith.constant 0 : index
    %c0_1 = arith.constant 0 : index
    %0 = vector.load %arg1[%c0, %c0_0, %c0_1] : memref<2x4x32xf32, #tpu.memory_space<vmem>>, vector<2x4x32xf32>
    %c0_2 = arith.constant 0 : index
    %c0_3 = arith.constant 0 : index
    %c0_4 = arith.constant 0 : index
    %1 = vector.load %arg2[%c0_2, %c0_3, %c0_4] : memref<2x1x32xf32, #tpu.memory_space<vmem>>, vector<2x1x32xf32>
    %2 = vector.broadcast %1 : vector<2x1x32xf32> to vector<2x4x32xf32>
    %3 = arith.mulf %0, %2 : vector<2x4x32xf32>
    %cst = arith.constant dense<0.000000e+00> : vector<2x4xf32>
    %4 = vector.multi_reduction <add>, %3, %cst [2] : vector<2x4x32xf32> to vector<2x4xf32>
    %5 = arith.mulf %0, %0 : vector<2x4x32xf32>
    %cst_5 = arith.constant dense<0.000000e+00> : vector<2x4xf32>
    %6 = vector.multi_reduction <add>, %5, %cst_5 [2] : vector<2x4x32xf32> to vector<2x4xf32>
    %7 = math.sqrt %6 : vector<2x4xf32>
    %8 = arith.mulf %1, %1 : vector<2x1x32xf32>
    %cst_6 = arith.constant dense<0.000000e+00> : vector<2x1xf32>
    %9 = vector.multi_reduction <add>, %8, %cst_6 [2] : vector<2x1x32xf32> to vector<2x1xf32>
    %10 = math.sqrt %9 : vector<2x1xf32>
    %cst_7 = arith.constant 9.99999996E-13 : f32
    %11 = vector.broadcast %cst_7 : f32 to vector<2x4xf32>
    %12 = arith.maximumf %7, %11 : vector<2x4xf32>
    %cst_8 = arith.constant 9.99999996E-13 : f32
    %13 = vector.broadcast %cst_8 : f32 to vector<2x1xf32>
    %14 = arith.maximumf %10, %13 : vector<2x1xf32>
    %15 = vector.broadcast %14 : vector<2x1xf32> to vector<2x4xf32>
    %16 = arith.mulf %12, %15 : vector<2x4xf32>
    %17 = tpu.reciprocal %16 : vector<2x4xf32> -> vector<2x4xf32>
    %18 = arith.mulf %4, %17 : vector<2x4xf32>
    %c0_9 = arith.constant 0 : index
    %c0_10 = arith.constant 0 : index
    %19 = vector.load %arg3[%c0_9, %c0_10] : memref<2x4xf32, #tpu.memory_space<vmem>>, vector<2x4xf32>
    tpu.vector_store %arg3[%c0_9, %c0_10], %18 {strides = array<i32>} : memref<2x4xf32, #tpu.memory_space<vmem>>, vector<2x4xf32>,
    return
  }
  func.func @transform_0(%arg0: i32) -> (i32, i32, i32) {
    %c0_i32 = arith.constant 0 : i32
    %c0_i32_0 = arith.constant 0 : i32
    %c0_i32_1 = arith.constant 0 : i32
    %c0_i32_2 = arith.constant 0 : i32
    return %c0_i32, %c0_i32_0, %c0_i32_1 : i32, i32, i32
  }
  func.func @transform_1(%arg0: i32) -> (i32, i32, i32) {
    %c0_i32 = arith.constant 0 : i32
    %c0_i32_0 = arith.constant 0 : i32
    %c0_i32_1 = arith.constant 0 : i32
    %c0_i32_2 = arith.constant 0 : i32
    return %c0_i32, %c0_i32_0, %c0_i32_1 : i32, i32, i32
  }
  func.func @transform_2(%arg0: i32) -> (i32, i32) {
    %c0_i32 = arith.constant 0 : i32
    %c0_i32_0 = arith.constant 0 : i32
    %c0_i32_1 = arith.constant 0 : i32
    return %c0_i32, %c0_i32_0 : i32, i32
  }
}

</mosaic_0001>

<llo_original>
// kernel: one_edge_model_forward.3
$region0: #{one_edge_model_forward.3}
  #allocation0 [shape = 'u32[]', space=smem, size = 0x4, offset = 0x4, fixed_abs, tag = 'smem constant byte address 0x4 - core index']
  #allocation1 [shape = 'u32[72,128]{1,0:T(1,128)}', space=vmem, size = 0x9000, scoped, tag = 'internal scratch']
  %s0 = inlined_call_operand.vmem [shape: f32[2,4,32], index: 0, kind: input, shape index: {}]
  %s1 = inlined_call_operand.vmem [shape: f32[2,1,32], index: 1, kind: input, shape index: {}]
  %s2 = inlined_call_operand.hbm [shape: f32[2,4], index: 2, kind: output, shape index: {}]
  %s3 = sld [smem:[#allocation0]]
  $region18: #{one_edge_model_forward.3} parent=0
    _
  %s5 = ssub.s32 1, %s3
  %s6 = scalar_select 0, %s5, %s3
  $region1: #{one_edge_model_forward.3} parent=0
    #allocation2 [shape = 'u8[1024]{0}', space=vmem, size = 0x400, scoped, tag = 'output window, operand 0, single buffered']
    #allocation3 [shape = 's32[1]{0}', space=sflag, size = 0x4, scoped, tag = 'scoped memory for one_edge_model_forward.3']
    %7 = vsyncpa [#allocation3], 0
    // Predicated region
    $region2: #{one_edge_model_forward.3} parent=1 // pred_check
      _
    $region3: #{one_edge_model_forward.3} parent=1 // pred_check_branch
      %9 = sbr.rel (0) target = $region5
    $region4: #{one_edge_model_forward.3} parent=1 // pred_region
      _
    $region5: #{one_edge_model_forward.3} parent=1 // pred_fallthru
      _
    // Predicated region
    $region6: #{one_edge_model_forward.3} parent=1 // pred_check
      _
    $region7: #{one_edge_model_forward.3} parent=1 // pred_check_branch
      %11 = sbr.rel (0) target = $region9
    $region8: #{one_edge_model_forward.3} parent=1 // pred_region
      _
    $region9: #{one_edge_model_forward.3} parent=1 // pred_fallthru
      _
    %v12 = vld [vmem:[%s0] sm:$0xf]
    %v13 = vld [vmem:[%s0 + $0x4] sm:$0xf]
    %v14 = vld [vmem:[%s1] sm:$0x1]
    %v15 = vld [vmem:[%s1 + $0x1] sm:$0x1]
    %v18 = vperm.slane %v14, 0
    %v19 = vperm.slane %v15, 0
    %v22 = vmul.f32 %v12, %v18
    %v23 = vmul.f32 %v13, %v19
    %vm24 = vcmask 257024
    %v25 = vsel %vm24, %v22, 0.0
    %26 = vadd.xlane.f32.xlu0 %v25
    %v27 = vpop.xlane.xlu0 %26
    %v28 = vsel %vm24, %v23, 0.0
    %29 = vadd.xlane.f32.xlu0 %v28
    %v30 = vpop.xlane.xlu0 %29
    %v31 = vmul.f32 %v12, %v12
    %v32 = vmul.f32 %v13, %v13
    %v33 = vsel %vm24, %v31, 0.0
    %34 = vadd.xlane.f32.xlu0 %v33
    %v35 = vpop.xlane.xlu0 %34
    %v36 = vsel %vm24, %v32, 0.0
    %37 = vadd.xlane.f32.xlu0 %v36
    %v38 = vpop.xlane.xlu0 %37
    %v39 = vrsqrt.pop %v35
    %v40 = vmul.f32 %v39, %v35
    %v41 = vmul.f32 %v40, %v39
    %v42 = vmul.f32 0.5, %v41
    %v43 = vsub.f32 1.5, %v42
    %v44 = vmul.f32 %v39, %v43
    %v45 = vmul.f32 %v35, %v44
    %vm46 = vcmp.eq.f32.partialorder %v35, inf
    %v47 = vsel %vm46, %v35, %v45
    %vm48 = vcmp.eq.f32.partialorder %v35, 0.0
    %v49 = vand.u32 %v35, 2147483648
    %v50 = vsel %vm48, %v49, %v47
    %v51 = vrsqrt.pop %v38
    %v52 = vmul.f32 %v51, %v38
    %v53 = vmul.f32 %v52, %v51
    %v54 = vmul.f32 0.5, %v53
    %v55 = vsub.f32 1.5, %v54
    %v56 = vmul.f32 %v51, %v55
    %v57 = vmul.f32 %v38, %v56
    %vm58 = vcmp.eq.f32.partialorder %v38, inf
    %v59 = vsel %vm58, %v38, %v57
    %vm60 = vcmp.eq.f32.partialorder %v38, 0.0
    %v61 = vand.u32 %v38, 2147483648
    %v62 = vsel %vm60, %v61, %v59
    %v63 = vmul.f32 %v14, %v14
    %v64 = vmul.f32 %v15, %v15
    %vm65 = vcmask 253952
    %v66 = vsel %vm65, %v63, 0.0
    %67 = vadd.xlane.f32.xlu0 %v66
    %v68 = vpop.xlane.xlu0 %67
    %v69 = vsel %vm65, %v64, 0.0
    %70 = vadd.xlane.f32.xlu0 %v69
    %v71 = vpop.xlane.xlu0 %70
    %v72 = vrsqrt.pop %v68
    %v73 = vmul.f32 %v72, %v68
    %v74 = vmul.f32 %v73, %v72
    %v75 = vmul.f32 0.5, %v74
    %v76 = vsub.f32 1.5, %v75
    %v77 = vmul.f32 %v72, %v76
    %v78 = vmul.f32 %v68, %v77
    %vm79 = vcmp.eq.f32.partialorder %v68, inf
    %v80 = vsel %vm79, %v68, %v78
    %vm81 = vcmp.eq.f32.partialorder %v68, 0.0
    %v82 = vand.u32 %v68, 2147483648
    %v83 = vsel %vm81, %v82, %v80
    %v84 = vrsqrt.pop %v71
    %v85 = vmul.f32 %v84, %v71
    %v86 = vmul.f32 %v85, %v84
    %v87 = vmul.f32 0.5, %v86
    %v88 = vsub.f32 1.5, %v87
    %v89 = vmul.f32 %v84, %v88
    %v90 = vmul.f32 %v71, %v89
    %vm91 = vcmp.eq.f32.partialorder %v71, inf
    %v92 = vsel %vm91, %v71, %v90
    %vm93 = vcmp.eq.f32.partialorder %v71, 0.0
    %v94 = vand.u32 %v71, 2147483648
    %v95 = vsel %vm93, %v94, %v92
    %v96 = vmax.f32 %v50, 1e-12
    %v97 = vmax.f32 %v62, 1e-12
    %v98 = vmax.f32 %v83, 1e-12
    %v99 = vmax.f32 %v95, 1e-12
    %v100 = vperm.slane %v98, 0
    %v101 = vperm.slane %v99, 0
    %v102 = vmul.f32 %v96, %v100
    %v103 = vmul.f32 %v97, %v101
    %v104 = vrcp.pop %v102
    %v105 = vmul.f32 %v102, %v104
    %v106 = vsub.f32 1.0, %v105
    %v107 = vmul.f32 %v104, %v106
    %v108 = vadd.f32 %v104, %v107
    %vm109 = vweird.f32 %v102
    %vm110 = vweird.f32 %v104
    %vm111 = vmor %vm109, %vm110
    %v112 = vsel %vm111, %v104, %v108
    %v113 = vand.u32 2147483647, %v102
    %vm114 = vcmp.eq.f32.partialorder %v113, 8.507059e+37
    %v115 = vand.u32 %v102, 2147483648
    %v116 = vor.u32 1.1754944e-38, %v115
    %v117 = vsel %vm114, %v116, %v112
    %v118 = vrcp.pop %v103
    %v119 = vmul.f32 %v103, %v118
    %v120 = vsub.f32 1.0, %v119
    %v121 = vmul.f32 %v118, %v120
    %v122 = vadd.f32 %v118, %v121
    %vm123 = vweird.f32 %v103
    %vm124 = vweird.f32 %v118
    %vm125 = vmor %vm123, %vm124
    %v126 = vsel %vm125, %v118, %v122
    %v127 = vand.u32 2147483647, %v103
    %vm128 = vcmp.eq.f32.partialorder %v127, 8.507059e+37
    %v129 = vand.u32 %v103, 2147483648
    %v130 = vor.u32 1.1754944e-38, %v129
    %v131 = vsel %vm128, %v130, %v126
    %v132 = vmul.f32 %v27, %v117
    %v133 = vmul.f32 %v30, %v131
    %v136 = vlaneseq
    %v137 = vand.u32 %v136, 127
    %v138 = vperm.slane %v132, %v137
    %v139 = vperm.slane %v133, %v137
    %vm140 = vcmask 1041409
    %v141 = vsel %vm140, %v139, %v138
    %vm143 = vcmask 25600
    %144 = vst.msk [vmem:[#allocation2] sm:$0x3] %vm143, %v141
    // Predicated region
    $region10: #{one_edge_model_forward.3} parent=1 // pred_check
      _
    $region11: #{one_edge_model_forward.3} parent=1 // pred_check_branch
      %146 = sbr.rel (0) target = $region13
    $region12: #{one_edge_model_forward.3} parent=1 // pred_region
      %148 = vsyncadd [#allocation3], 0
      %s150 = sshll.u32 [#allocation2], 4
      %s151 = int_to_ptr.vmem [resolvable:$true] %s150
      %s152 = sshll.u32 %s2, 4
      %s153 = int_to_ptr.hbm [resolvable:$true] %s152
      %155 = dma.vmem_to_hbm [thread:$0]  %s151, 32, %s153, [#allocation3]
    $region13: #{one_edge_model_forward.3} parent=1 // pred_fallthru
      _
    // Predicated region
    $region14: #{one_edge_model_forward.3} parent=1 // pred_check
      _
    $region15: #{one_edge_model_forward.3} parent=1 // pred_check_branch
      %157 = sbr.rel (0) target = $region17
    $region16: #{one_edge_model_forward.3} parent=1 // pred_region
      %159 = dma.done [#allocation3], 32
    $region17: #{one_edge_model_forward.3} parent=1 // pred_fallthru
      _
    %160 = vsyncpa [#allocation3], 1

// kernel: one_edge_model_forward.2
$region0: #{one_edge_model_forward.2}
  #allocation0 [shape = 'u32[]', space=smem, size = 0x4, offset = 0x4, fixed_abs, tag = 'smem constant byte address 0x4 - core index']
  #allocation1 [shape = 'u32[72,128]{1,0:T(1,128)}', space=vmem, size = 0x9000, scoped, tag = 'internal scratch']
  #allocation2 [shape = 'f32[128,128]{1,0:T(8,128)}', space=vmem, size = 0x10000, scoped, tag = 'scratch operand']
  #allocation3 [shape = 's32[1]{0}', space=sflag, size = 0x4, scoped, tag = 'scoped memory for one_edge_model_forward.2']
  #allocation4 [shape = 'u8[512]{0}', space=smem, size = 0x200, scoped, tag = 'prefetched SMEM operand 0']
  %s0 = inlined_call_operand.vmem [shape: s32[16], index: 0, kind: input, shape index: {}]
  %s1 = inlined_call_operand.vmem [shape: f32[256,32], index: 1, kind: input, shape index: {}]
  %s2 = inlined_call_operand.vmem [shape: f32[128,32], index: 2, kind: input, shape index: {}]
  %s3 = inlined_call_operand.vmem [shape: f32[1,32], index: 3, kind: input, shape index: {}]
  %s4 = inlined_call_operand.vmem [shape: f32[16,32], index: 4, kind: output, shape index: {}]
  %s5 = sld [smem:[#allocation0]]
  $region45: #{one_edge_model_forward.2} parent=0
    _
  %s7 = ssub.s32 1, %s5
  %s8 = scalar_select 0, %s7, %s5
  %s10 = sshll.u32 %s0, 4
  %s11 = int_to_ptr.vmem [resolvable:$true] %s10
  %13 = dma.vmem_to_smem %s11, 16, [#allocation4], [#allocation3]
  %15 = dma.done [#allocation3], 16
  %16 = sfence
  loop: start=0, step=1, limit=4
  $region2: #{one_edge_model_forward.2} parent=0 // loop_pre_header
    _
  $region3: #{one_edge_model_forward.2} parent=0 // loop_header
    %s18 = sphi 0, %s22
    %p19 = scmp.ge.s32.totalorder %s18, 4
    %s28 = sphi 0, %s30
    %s31 = sphi 0, %s28
    %s32 = sphi 0, %s31
    %s48 = sphi 0, %s32
    %s52 = sphi 0, %s52
    %s54 = sphi 0, %s52
    %s55 = sphi 0, %s54
    %s69 = sphi 0, %s55
    %s73 = sphi 0, %s73
    %s75 = sphi 0, %s73
    %s76 = sphi 0, %s75
    %s90 = sphi 0, %s76
    %s96 = sphi 0, %s98
    %s99 = sphi 0, %s96
    %s100 = sphi 0, %s99
    %s116 = sphi 0, %s100
  $region4: #{one_edge_model_forward.2} parent=0 // loop_header_branch
    %21 = sbr.rel (%p19) target = $region8
  $region5: #{one_edge_model_forward.2} parent=0 // loop_body
    %s23 = ssub.s32 %s18, 1
    %s24 = ssub.s32 %s18, 2
    %s25 = sadd.s32 %s18, 1
    %s26 = ssub.s32 %s18, %s25
    %p27 = scmp.eq.s32.totalorder %s26, 0
    %s29 = sadd.s32 %s28, 1
    %s30 = scalar_select %p27, %s28, %s29
    %p33 = pneg %p27
    %p34 = scmp.eq.s32.totalorder %s18, 1
    %p35 = por %p33, %p34
    %p36 = scmp.ne.s32.totalorder %s28, %s31
    %p37 = scmp.eq.s32.totalorder %s18, 0
    %p38 = por %p36, %p37
    %p39 = scmp.ne.s32.totalorder %s28, %s31
    %p40 = scmp.eq.s32.totalorder %s23, 1
    %p41 = por %p39, %p40
    %p42 = scmp.ne.s32.totalorder %s31, %s32
    %p43 = scmp.eq.s32.totalorder %s23, 0
    %p44 = por %p42, %p43
    %p45 = scmp.ne.s32.totalorder %s31, %s32
    %p46 = scmp.eq.s32.totalorder %s24, 1
    %p47 = por %p45, %p46
    %p49 = scmp.ne.s32.totalorder %s32, %s48
    %p50 = scmp.eq.s32.totalorder %s24, 0
    %p51 = por %p49, %p50
    %s53 = sadd.s32 %s52, 1
    %p56 = scmp.eq.s32.totalorder %s18, 1
    %p57 = scmp.ne.s32.totalorder %s52, %s54
    %p58 = scmp.eq.s32.totalorder %s18, 0
    %p59 = por %p57, %p58
    %p60 = scmp.ne.s32.totalorder %s52, %s54
    %p61 = scmp.eq.s32.totalorder %s23, 1
    %p62 = por %p60, %p61
    %p63 = scmp.ne.s32.totalorder %s54, %s55
    %p64 = scmp.eq.s32.totalorder %s23, 0
    %p65 = por %p63, %p64
    %p66 = scmp.ne.s32.totalorder %s54, %s55
    %p67 = scmp.eq.s32.totalorder %s24, 1
    %p68 = por %p66, %p67
    %p70 = scmp.ne.s32.totalorder %s55, %s69
    %p71 = scmp.eq.s32.totalorder %s24, 0
    %p72 = por %p70, %p71
    %s74 = sadd.s32 %s73, 1
    %p77 = scmp.eq.s32.totalorder %s18, 1
    %p78 = scmp.ne.s32.totalorder %s73, %s75
    %p79 = scmp.eq.s32.totalorder %s18, 0
    %p80 = por %p78, %p79
    %p81 = scmp.ne.s32.totalorder %s73, %s75
    %p82 = scmp.eq.s32.totalorder %s23, 1
    %p83 = por %p81, %p82
    %p84 = scmp.ne.s32.totalorder %s75, %s76
    %p85 = scmp.eq.s32.totalorder %s23, 0
    %p86 = por %p84, %p85
    %p87 = scmp.ne.s32.totalorder %s75, %s76
    %p88 = scmp.eq.s32.totalorder %s24, 1
    %p89 = por %p87, %p88
    %p91 = scmp.ne.s32.totalorder %s76, %s90
    %p92 = scmp.eq.s32.totalorder %s24, 0
    %p93 = por %p91, %p92
    %s94 = ssub.s32 %s18, %s25
    %p95 = scmp.eq.s32.totalorder %s94, 0
    %s97 = sadd.s32 %s96, 1
    %s98 = scalar_select %p95, %s96, %s97
    %p101 = pneg %p95
    %p102 = scmp.eq.s32.totalorder %s18, 1
    %p103 = por %p101, %p102
    %p104 = scmp.ne.s32.totalorder %s96, %s99
    %p105 = scmp.eq.s32.totalorder %s18, 0
    %p106 = por %p104, %p105
    %p107 = scmp.ne.s32.totalorder %s96, %s99
    %p108 = scmp.eq.s32.totalorder %s23, 1
    %p109 = por %p107, %p108
    %p110 = scmp.ne.s32.totalorder %s99, %s100
    %p111 = scmp.eq.s32.totalorder %s23, 0
    %p112 = por %p110, %p111
    %p113 = scmp.ne.s32.totalorder %s99, %s100
    %p114 = scmp.eq.s32.totalorder %s24, 1
    %p115 = por %p113, %p114
    %p117 = scmp.ne.s32.totalorder %s100, %s116
    %p118 = scmp.eq.s32.totalorder %s24, 0
    %p119 = por %p117, %p118
    %p120 = scmp.le.s32.totalorder 1, %s18
    %p121 = scmp.lt.s32.totalorder %s18, 3
    %p122 = pnand %p120, %p121
    %p123 = pneg %p122
    // Predicated region
    $region9: #{one_edge_model_forward.2} parent=5 // pred_check
      _
    $region10: #{one_edge_model_forward.2} parent=5 // pred_check_branch
      %125 = sbr.rel (%p122) target = $region12
    $region11: #{one_edge_model_forward.2} parent=5 // pred_region
      %s126 = ssub.s32 %s18, 1
      // Predicated region
      $region13: #{one_edge_model_forward.2} parent=11 // pred_check
        %p127 = pneg %p65
      $region14: #{one_edge_model_forward.2} parent=11 // pred_check_branch
        %129 = sbr.rel (%p127) target = $region16
      $region15: #{one_edge_model_forward.2} parent=11 // pred_region
        _
      $region16: #{one_edge_model_forward.2} parent=11 // pred_fallthru
        _
      // Predicated region
      $region17: #{one_edge_model_forward.2} parent=11 // pred_check
        %p130 = pneg %p86
      $region18: #{one_edge_model_forward.2} parent=11 // pred_check_branch
        %132 = sbr.rel (%p130) target = $region20
      $region19: #{one_edge_model_forward.2} parent=11 // pred_region
        _
      $region20: #{one_edge_model_forward.2} parent=11 // pred_fallthru
        _
    $region12: #{one_edge_model_forward.2} parent=5 // pred_fallthru
      _
    %p133 = scmp.lt.s32.totalorder %s18, 2
    // Predicated region
    $region21: #{one_edge_model_forward.2} parent=5 // pred_check
      %p134 = pneg %p133
    $region22: #{one_edge_model_forward.2} parent=5 // pred_check_branch
      %136 = sbr.rel (%p134) target = $region24
    $region23: #{one_edge_model_forward.2} parent=5 // pred_region
      // Predicated region
      $region25: #{one_edge_model_forward.2} parent=23 // pred_check
        %p137 = pneg %p38
      $region26: #{one_edge_model_forward.2} parent=23 // pred_check_branch
        %139 = sbr.rel (%p137) target = $region28
      $region27: #{one_edge_model_forward.2} parent=23 // pred_region
        %s140 = smul.u32 16, %s18
        %p141 = scmp.lt.s32.totalorder %s140, 31
        %s142 = scalar_select %p141, %s140, 31
        %s143 = smul.addr %s142, 8
        %s144 = scalar_lea.vmem %s1, %s143
        %s145 = smul.u32 16, %s18
      $region28: #{one_edge_model_forward.2} parent=23 // pred_fallthru
        _
    $region24: #{one_edge_model_forward.2} parent=5 // pred_fallthru
      _
    %p146 = scmp.le.s32.totalorder 1, %s18
    %p147 = scmp.lt.s32.totalorder %s18, 3
    %p148 = pnand %p146, %p147
    %p149 = pneg %p148
    // Predicated region
    $region29: #{one_edge_model_forward.2} parent=5 // pred_check
      _
    $region30: #{one_edge_model_forward.2} parent=5 // pred_check_branch
      %151 = sbr.rel (%p148) target = $region32
    $region31: #{one_edge_model_forward.2} parent=5 // pred_region
      %s152 = ssub.s32 %s18, 1
      %s153 = smul.u32 16, %s23
      %p154 = scmp.lt.s32.totalorder %s153, 31
      %s155 = scalar_select %p154, %s153, 31
      %s156 = smul.addr %s155, 8
      %s157 = scalar_lea.vmem %s1, %s156
      %p158 = pneg %p44
      %p159 = pneg %p41
      %p160 = pneg %p65
      %p161 = pneg %p62
      %p162 = pneg %p86
      %p163 = pneg %p83
      %p164 = pneg %p112
      %p165 = pneg %p109
      %p166 = scmp.lt.s32.totalorder %s23, 1
      %s167 = scalar_select %p166, %s23, 1
      %s168 = smul.addr %s167, 8
      %s169 = scalar_lea.vmem %s4, %s168
      %s170 = smul.u32 16, %s23
      %p171 = scmp.lt.s32.totalorder %s170, 31
      %s172 = scalar_select %p171, %s170, 31
      %s173 = smul.addr %s172, 8
      %s174 = scalar_lea.vmem %s1, %s173
      %s175 = smul.u32 16, %s23
      %p176 = scmp.lt.s32.totalorder %s23, 1
      %s177 = scalar_select %p176, %s23, 1
      %s178 = smul.addr %s177, 8
      %s179 = scalar_lea.vmem %s4, %s178
      %s180 = smul.u32 %s23, 8
      %181 = vst [vmem:[#allocation2] sm:$0xff] 0.0
      %182 = vst [vmem:[#allocation2 + $0x8] sm:$0xff] 0.0
      %183 = vst [vmem:[#allocation2 + $0x10] sm:$0xff] 0.0
      %184 = vst [vmem:[#allocation2 + $0x18] sm:$0xff] 0.0
      %185 = vst [vmem:[#allocation2 + $0x20] sm:$0xff] 0.0
      %186 = vst [vmem:[#allocation2 + $0x28] sm:$0xff] 0.0
      %187 = vst [vmem:[#allocation2 + $0x30] sm:$0xff] 0.0
      %188 = vst [vmem:[#allocation2 + $0x38] sm:$0xff] 0.0
      %189 = vst [vmem:[#allocation2 + $0x40] sm:$0xff] 0.0
      %190 = vst [vmem:[#allocation2 + $0x48] sm:$0xff] 0.0
      %191 = vst [vmem:[#allocation2 + $0x50] sm:$0xff] 0.0
      %192 = vst [vmem:[#allocation2 + $0x58] sm:$0xff] 0.0
      %193 = vst [vmem:[#allocation2 + $0x60] sm:$0xff] 0.0
      %194 = vst [vmem:[#allocation2 + $0x68] sm:$0xff] 0.0
      %195 = vst [vmem:[#allocation2 + $0x70] sm:$0xff] 0.0
      %196 = vst [vmem:[#allocation2 + $0x78] sm:$0xff] 0.0
      %v197 = vld [vmem:[%s174] sm:$0xff]
      %v198 = vld [vmem:[%s174 + $0x8] sm:$0xff]
      %v199 = vld [vmem:[%s174 + $0x10] sm:$0xff]
      %v200 = vld [vmem:[%s174 + $0x18] sm:$0xff]
      %v201 = vld [vmem:[%s174 + $0x20] sm:$0xff]
      %v202 = vld [vmem:[%s174 + $0x28] sm:$0xff]
      %v203 = vld [vmem:[%s174 + $0x30] sm:$0xff]
      %v204 = vld [vmem:[%s174 + $0x38] sm:$0xff]
      %v205 = vld [vmem:[%s174 + $0x40] sm:$0xff]
      %v206 = vld [vmem:[%s174 + $0x48] sm:$0xff]
      %v207 = vld [vmem:[%s174 + $0x50] sm:$0xff]
      %v208 = vld [vmem:[%s174 + $0x58] sm:$0xff]
      %v209 = vld [vmem:[%s174 + $0x60] sm:$0xff]
      %v210 = vld [vmem:[%s174 + $0x68] sm:$0xff]
      %v211 = vld [vmem:[%s174 + $0x70] sm:$0xff]
      %v212 = vld [vmem:[%s174 + $0x78] sm:$0x3f]
      %vm213 = vcmask 261120
      %214 = vst.msk [vmem:[#allocation2] sm:$0xff] %vm213, %v197
      %215 = vst.msk [vmem:[#allocation2 + $0x8] sm:$0xff] %vm213, %v198
      %216 = vst.msk [vmem:[#allocation2 + $0x10] sm:$0xff] %vm213, %v199
      %217 = vst.msk [vmem:[#allocation2 + $0x18] sm:$0xff] %vm213, %v200
      %218 = vst.msk [vmem:[#allocation2 + $0x20] sm:$0xff] %vm213, %v201
      %219 = vst.msk [vmem:[#allocation2 + $0x28] sm:$0xff] %vm213, %v202
      %220 = vst.msk [vmem:[#allocation2 + $0x30] sm:$0xff] %vm213, %v203
      %221 = vst.msk [vmem:[#allocation2 + $0x38] sm:$0xff] %vm213, %v204
      %222 = vst.msk [vmem:[#allocation2 + $0x40] sm:$0xff] %vm213, %v205
      %223 = vst.msk [vmem:[#allocation2 + $0x48] sm:$0xff] %vm213, %v206
      %224 = vst.msk [vmem:[#allocation2 + $0x50] sm:$0xff] %vm213, %v207
      %225 = vst.msk [vmem:[#allocation2 + $0x58] sm:$0xff] %vm213, %v208
      %226 = vst.msk [vmem:[#allocation2 + $0x60] sm:$0xff] %vm213, %v209
      %227 = vst.msk [vmem:[#allocation2 + $0x68] sm:$0xff] %vm213, %v210
      %228 = vst.msk [vmem:[#allocation2 + $0x70] sm:$0xff] %vm213, %v211
      %vm229 = vcmask 259072
      %230 = vst.msk [vmem:[#allocation2 + $0x78] sm:$0x3f] %vm229, %v212
      %v231 = vld [vmem:[%s174 + $0x1] sm:$0xff]
      %v232 = vld [vmem:[%s174 + $0x9] sm:$0xff]
      %v233 = vld [vmem:[%s174 + $0x11] sm:$0xff]
      %v234 = vld [vmem:[%s174 + $0x19] sm:$0xff]
      %v235 = vld [vmem:[%s174 + $0x21] sm:$0xff]
      %v236 = vld [vmem:[%s174 + $0x29] sm:$0xff]
      %v237 = vld [vmem:[%s174 + $0x31] sm:$0xff]
      %v238 = vld [vmem:[%s174 + $0x39] sm:$0xff]
      %v239 = vld [vmem:[%s174 + $0x41] sm:$0xff]
      %v240 = vld [vmem:[%s174 + $0x49] sm:$0xff]
      %v241 = vld [vmem:[%s174 + $0x51] sm:$0xff]
      %v242 = vld [vmem:[%s174 + $0x59] sm:$0xff]
      %v243 = vld [vmem:[%s174 + $0x61] sm:$0xff]
      %v244 = vld [vmem:[%s174 + $0x69] sm:$0xff]
      %v245 = vld [vmem:[%s174 + $0x71] sm:$0xff]
      %v246 = vld [vmem:[%s174 + $0x79] sm:$0x3f]
      %263 = vrot.lane.b32.xlu0 %v231, 32
      %v264 = vpop.permute.xlu0 %263
      %265 = vrot.lane.b32.xlu0 %v232, 32
      %v266 = vpop.permute.xlu0 %265
      %267 = vrot.lane.b32.xlu0 %v233, 32
      %v268 = vpop.permute.xlu0 %267
      %269 = vrot.lane.b32.xlu0 %v234, 32
      %v270 = vpop.permute.xlu0 %269
      %271 = vrot.lane.b32.xlu0 %v235, 32
      %v272 = vpop.permute.xlu0 %271
      %273 = vrot.lane.b32.xlu0 %v236, 32
      %v274 = vpop.permute.xlu0 %273
      %275 = vrot.lane.b32.xlu0 %v237, 32
      %v276 = vpop.permute.xlu0 %275
      %277 = vrot.lane.b32.xlu0 %v238, 32
      %v278 = vpop.permute.xlu0 %277
      %279 = vrot.lane.b32.xlu0 %v239, 32
      %v280 = vpop.permute.xlu0 %279
      %281 = vrot.lane.b32.xlu0 %v240, 32
      %v282 = vpop.permute.xlu0 %281
      %283 = vrot.lane.b32.xlu0 %v241, 32
      %v284 = vpop.permute.xlu0 %283
      %285 = vrot.lane.b32.xlu0 %v242, 32
      %v286 = vpop.permute.xlu0 %285
      %287 = vrot.lane.b32.xlu0 %v243, 32
      %v288 = vpop.permute.xlu0 %287
      %289 = vrot.lane.b32.xlu0 %v244, 32
      %v290 = vpop.permute.xlu0 %289
      %291 = vrot.lane.b32.xlu0 %v245, 32
      %v292 = vpop.permute.xlu0 %291
      %293 = vrot.lane.b32.xlu0 %v246, 32
      %v294 = vpop.permute.xlu0 %293
      %vm311 = vcmask 523520
      %312 = vst.msk [vmem:[#allocation2] sm:$0xff] %vm311, %v264
      %313 = vst.msk [vmem:[#allocation2 + $0x8] sm:$0xff] %vm311, %v266
      %314 = vst.msk [vmem:[#allocation2 + $0x10] sm:$0xff] %vm311, %v268
      %315 = vst.msk [vmem:[#allocation2 + $0x18] sm:$0xff] %vm311, %v270
      %316 = vst.msk [vmem:[#allocation2 + $0x20] sm:$0xff] %vm311, %v272
      %317 = vst.msk [vmem:[#allocation2 + $0x28] sm:$0xff] %vm311, %v274
      %318 = vst.msk [vmem:[#allocation2 + $0x30] sm:$0xff] %vm311, %v276
      %319 = vst.msk [vmem:[#allocation2 + $0x38] sm:$0xff] %vm311, %v278
      %320 = vst.msk [vmem:[#allocation2 + $0x40] sm:$0xff] %vm311, %v280
      %321 = vst.msk [vmem:[#allocation2 + $0x48] sm:$0xff] %vm311, %v282
      %322 = vst.msk [vmem:[#allocation2 + $0x50] sm:$0xff] %vm311, %v284
      %323 = vst.msk [vmem:[#allocation2 + $0x58] sm:$0xff] %vm311, %v286
      %324 = vst.msk [vmem:[#allocation2 + $0x60] sm:$0xff] %vm311, %v288
      %325 = vst.msk [vmem:[#allocation2 + $0x68] sm:$0xff] %vm311, %v290
      %326 = vst.msk [vmem:[#allocation2 + $0x70] sm:$0xff] %vm311, %v292
      %vm327 = vcmask 521472
      %328 = vst.msk [vmem:[#allocation2 + $0x78] sm:$0x3f] %vm327, %v294
      %v329 = vld [vmem:[%s174 + $0x2] sm:$0xff]
      %v330 = vld [vmem:[%s174 + $0xa] sm:$0xff]
      %v331 = vld [vmem:[%s174 + $0x12] sm:$0xff]
      %v332 = vld [vmem:[%s174 + $0x1a] sm:$0xff]
      %v333 = vld [vmem:[%s174 + $0x22] sm:$0xff]
      %v334 = vld [vmem:[%s174 + $0x2a] sm:$0xff]
      %v335 = vld [vmem:[%s174 + $0x32] sm:$0xff]
      %v336 = vld [vmem:[%s174 + $0x3a] sm:$0xff]
      %v337 = vld [vmem:[%s174 + $0x42] sm:$0xff]
      %v338 = vld [vmem:[%s174 + $0x4a] sm:$0xff]
      %v339 = vld [vmem:[%s174 + $0x52] sm:$0xff]
      %v340 = vld [vmem:[%s174 + $0x5a] sm:$0xff]
      %v341 = vld [vmem:[%s174 + $0x62] sm:$0xff]
      %v342 = vld [vmem:[%s174 + $0x6a] sm:$0xff]
      %v343 = vld [vmem:[%s174 + $0x72] sm:$0xff]
      %v344 = vld [vmem:[%s174 + $0x7a] sm:$0x3f]
      %361 = vrot.lane.b32.xlu0 %v329, 64
      %v362 = vpop.permute.xlu0 %361
      %363 = vrot.lane.b32.xlu0 %v330, 64
      %v364 = vpop.permute.xlu0 %363
      %365 = vrot.lane.b32.xlu0 %v331, 64
      %v366 = vpop.permute.xlu0 %365
      %367 = vrot.lane.b32.xlu0 %v332, 64
      %v368 = vpop.permute.xlu0 %367
      %369 = vrot.lane.b32.xlu0 %v333, 64
      %v370 = vpop.permute.xlu0 %369
      %371 = vrot.lane.b32.xlu0 %v334, 64
      %v372 = vpop.permute.xlu0 %371
      %373 = vrot.lane.b32.xlu0 %v335, 64
      %v374 = vpop.permute.xlu0 %373
      %375 = vrot.lane.b32.xlu0 %v336, 64
      %v376 = vpop.permute.xlu0 %375
      %377 = vrot.lane.b32.xlu0 %v337, 64
      %v378 = vpop.permute.xlu0 %377
      %379 = vrot.lane.b32.xlu0 %v338, 64
      %v380 = vpop.permute.xlu0 %379
      %381 = vrot.lane.b32.xlu0 %v339, 64
      %v382 = vpop.permute.xlu0 %381
      %383 = vrot.lane.b32.xlu0 %v340, 64
      %v384 = vpop.permute.xlu0 %383
      %385 = vrot.lane.b32.xlu0 %v341, 64
      %v386 = vpop.permute.xlu0 %385
      %387 = vrot.lane.b32.xlu0 %v342, 64
      %v388 = vpop.permute.xlu0 %387
      %389 = vrot.lane.b32.xlu0 %v343, 64
      %v390 = vpop.permute.xlu0 %389
      %391 = vrot.lane.b32.xlu0 %v344, 64
      %v392 = vpop.permute.xlu0 %391
      %vm409 = vcmask 785920
      %410 = vst.msk [vmem:[#allocation2] sm:$0xff] %vm409, %v362
      %411 = vst.msk [vmem:[#allocation2 + $0x8] sm:$0xff] %vm409, %v364
      %412 = vst.msk [vmem:[#allocation2 + $0x10] sm:$0xff] %vm409, %v366
      %413 = vst.msk [vmem:[#allocation2 + $0x18] sm:$0xff] %vm409, %v368
      %414 = vst.msk [vmem:[#allocation2 + $0x20] sm:$0xff] %vm409, %v370
      %415 = vst.msk [vmem:[#allocation2 + $0x28] sm:$0xff] %vm409, %v372
      %416 = vst.msk [vmem:[#allocation2 + $0x30] sm:$0xff] %vm409, %v374
      %417 = vst.msk [vmem:[#allocation2 + $0x38] sm:$0xff] %vm409, %v376
      %418 = vst.msk [vmem:[#allocation2 + $0x40] sm:$0xff] %vm409, %v378
      %419 = vst.msk [vmem:[#allocation2 + $0x48] sm:$0xff] %vm409, %v380
      %420 = vst.msk [vmem:[#allocation2 + $0x50] sm:$0xff] %vm409, %v382
      %421 = vst.msk [vmem:[#allocation2 + $0x58] sm:$0xff] %vm409, %v384
      %422 = vst.msk [vmem:[#allocation2 + $0x60] sm:$0xff] %vm409, %v386
      %423 = vst.msk [vmem:[#allocation2 + $0x68] sm:$0xff] %vm409, %v388
      %424 = vst.msk [vmem:[#allocation2 + $0x70] sm:$0xff] %vm409, %v390
      %vm425 = vcmask 783872
      %426 = vst.msk [vmem:[#allocation2 + $0x78] sm:$0x3f] %vm425, %v392
      %v427 = vld [vmem:[#allocation2] sm:$0xff]
      %v428 = vld [vmem:[#allocation2 + $0x8] sm:$0xff]
      %v429 = vld [vmem:[#allocation2 + $0x10] sm:$0xff]
      %v430 = vld [vmem:[#allocation2 + $0x18] sm:$0xff]
      %v431 = vld [vmem:[#allocation2 + $0x20] sm:$0xff]
      %v432 = vld [vmem:[#allocation2 + $0x28] sm:$0xff]
      %v433 = vld [vmem:[#allocation2 + $0x30] sm:$0xff]
      %v434 = vld [vmem:[#allocation2 + $0x38] sm:$0xff]
      %v435 = vld [vmem:[#allocation2 + $0x40] sm:$0xff]
      %v436 = vld [vmem:[#allocation2 + $0x48] sm:$0xff]
      %v437 = vld [vmem:[#allocation2 + $0x50] sm:$0xff]
      %v438 = vld [vmem:[#allocation2 + $0x58] sm:$0xff]
      %v439 = vld [vmem:[#allocation2 + $0x60] sm:$0xff]
      %v440 = vld [vmem:[#allocation2 + $0x68] sm:$0xff]
      %v441 = vld [vmem:[#allocation2 + $0x70] sm:$0xff]
      %v442 = vld [vmem:[#allocation2 + $0x78] sm:$0xff]
      %v443 = vld [vmem:[%s2] sm:$0xff]
      %v444 = vld [vmem:[%s2 + $0x8] sm:$0xff]
      %v445 = vld [vmem:[%s2 + $0x10] sm:$0xff]
      %v446 = vld [vmem:[%s2 + $0x18] sm:$0xff]
      %v447 = vld [vmem:[%s2 + $0x20] sm:$0xff]
      %v448 = vld [vmem:[%s2 + $0x28] sm:$0xff]
      %v449 = vld [vmem:[%s2 + $0x30] sm:$0xff]
      %v450 = vld [vmem:[%s2 + $0x38] sm:$0xff]
      %v451 = vld [vmem:[%s2 + $0x40] sm:$0xff]
      %v452 = vld [vmem:[%s2 + $0x48] sm:$0xff]
      %v453 = vld [vmem:[%s2 + $0x50] sm:$0xff]
      %v454 = vld [vmem:[%s2 + $0x58] sm:$0xff]
      %v455 = vld [vmem:[%s2 + $0x60] sm:$0xff]
      %v456 = vld [vmem:[%s2 + $0x68] sm:$0xff]
      %v457 = vld [vmem:[%s2 + $0x70] sm:$0xff]
      %v458 = vld [vmem:[%s2 + $0x78] sm:$0xff]
      %v459 = vld [vmem:[%s3] sm:$0x1]
      %v461 = vperm.slane %v459, 0
      %463 = vmatpush.msra.mxu0 %v458
      %464 = vmatpush.msra.mxu0 %v457
      %465 = vmatpush.msra.mxu0 %v456
      %466 = vmatpush.msra.mxu0 %v455
      %467 = vmatpush.msra.mxu0 %v454
      %468 = vmatpush.msra.mxu0 %v453
      %469 = vmatpush.msra.mxu0 %v452
      %470 = vmatpush.msra.mxu0 %v451
      %471 = vmatpush.msra.mxu0 %v450
      %472 = vmatpush.msra.mxu0 %v449
      %473 = vmatpush.msra.mxu0 %v448
      %474 = vmatpush.msra.mxu0 %v447
      %475 = vmatpush.msra.mxu0 %v446
      %476 = vmatpush.msra.mxu0 %v445
      %477 = vmatpush.msra.mxu0 %v444
      %478 = vmatpush.msra.mxu0 %v443
      %479 = vmatmul.f32.gmra.mxu0 %v427
      %v480 = vpop.f32.mrf.mxu0
      %v481 = vadd.f32 %v461, %v480
      %482 = vmatmul.f32.gmra.mxu0 %v428
      %v483 = vpop.f32.mrf.mxu0
      %v484 = vadd.f32 %v461, %v483
      %485 = vmatmul.f32.gmra.mxu0 %v429
      %v486 = vpop.f32.mrf.mxu0
      %v487 = vadd.f32 %v461, %v486
      %488 = vmatmul.f32.gmra.mxu0 %v430
      %v489 = vpop.f32.mrf.mxu0
      %v490 = vadd.f32 %v461, %v489
      %491 = vmatmul.f32.gmra.mxu0 %v431
      %v492 = vpop.f32.mrf.mxu0
      %v493 = vadd.f32 %v461, %v492
      %494 = vmatmul.f32.gmra.mxu0 %v432
      %v495 = vpop.f32.mrf.mxu0
      %v496 = vadd.f32 %v461, %v495
      %497 = vmatmul.f32.gmra.mxu0 %v433
      %v498 = vpop.f32.mrf.mxu0
      %v499 = vadd.f32 %v461, %v498
      %500 = vmatmul.f32.gmra.mxu0 %v434
      %v501 = vpop.f32.mrf.mxu0
      %v502 = vadd.f32 %v461, %v501
      %503 = vmatmul.f32.gmra.mxu0 %v435
      %v504 = vpop.f32.mrf.mxu0
      %v505 = vadd.f32 %v461, %v504
      %506 = vmatmul.f32.gmra.mxu0 %v436
      %v507 = vpop.f32.mrf.mxu0
      %v508 = vadd.f32 %v461, %v507
      %509 = vmatmul.f32.gmra.mxu0 %v437
      %v510 = vpop.f32.mrf.mxu0
      %v511 = vadd.f32 %v461, %v510
      %512 = vmatmul.f32.gmra.mxu0 %v438
      %v513 = vpop.f32.mrf.mxu0
      %v514 = vadd.f32 %v461, %v513
      %515 = vmatmul.f32.gmra.mxu0 %v439
      %v516 = vpop.f32.mrf.mxu0
      %v517 = vadd.f32 %v461, %v516
      %518 = vmatmul.f32.gmra.mxu0 %v440
      %v519 = vpop.f32.mrf.mxu0
      %v520 = vadd.f32 %v461, %v519
      %521 = vmatmul.f32.gmra.mxu0 %v441
      %v522 = vpop.f32.mrf.mxu0
      %v523 = vadd.f32 %v461, %v522
      %524 = vmatmul.f32.gmra.mxu0 %v442
      %v525 = vpop.f32.mrf.mxu0
      %v526 = vadd.f32 %v461, %v525
      %527 = vdwg.mxu0
      %v528 = vlaneseq
      %v529 = vshrl.u32 %v528, 7
      %v530 = vadd.s32 %v529, 8
      %s531 = sld [smem:[#allocation4 + %s180]]
      %v532 = vstv %s531
      %vm533 = vcmp.lt.s32.totalorder %v529, %v532
      %vm534 = vcmp.lt.s32.totalorder %v530, %v532
      %v535 = vsel %vm533, 1, 0
      %v536 = vsel %vm534, 1, 0
      %vm537 = vcmp.eq.s32.totalorder %v535, 1
      %vm538 = vcmp.eq.s32.totalorder %v536, 1
      %v539 = vsel %vm537, %v481, -inf
      %v540 = vsel %vm538, %v484, -inf
      %v541 = vsel %vm213, %v539, -inf
      %v542 = vsel %vm213, %v540, -inf
      %v543 = vmax.f32 %v541, %v542
      %v544 = vrot.slane %v543, 4
      %v545 = vmax.f32 %v543, %v544
      %v546 = vrot.slane %v545, 2
      %v547 = vmax.f32 %v545, %v546
      %v548 = vrot.slane %v547, 1
      %v549 = vmax.f32 %v547, %v548
      %v550 = vmax.f32 %v549, 0.0
      %vm551 = vcmask 253952
      %552 = vst.msk [vmem:[%s179] sm:$0x1] %vm551, %v550
      %s553 = sadd.s32 %s180, 1
      %s554 = sld [smem:[#allocation4 + %s553]]
      %v555 = vstv %s554
      %vm556 = vcmp.lt.s32.totalorder %v529, %v555
      %vm557 = vcmp.lt.s32.totalorder %v530, %v555
      %v558 = vsel %vm556, 1, 0
      %v559 = vsel %vm557, 1, 0
      %vm560 = vcmp.eq.s32.totalorder %v558, 1
      %vm561 = vcmp.eq.s32.totalorder %v559, 1
      %v562 = vsel %vm560, %v487, -inf
      %v563 = vsel %vm561, %v490, -inf
      %v564 = vsel %vm213, %v562, -inf
      %v565 = vsel %vm213, %v563, -inf
      %v566 = vmax.f32 %v564, %v565
      %v567 = vrot.slane %v566, 4
      %v568 = vmax.f32 %v566, %v567
      %v569 = vrot.slane %v568, 2
      %v570 = vmax.f32 %v568, %v569
      %v571 = vrot.slane %v570, 1
      %v572 = vmax.f32 %v570, %v571
      %v573 = vmax.f32 %v572, 0.0
      %574 = vst.msk [vmem:[%s179 + $0x1] sm:$0x1] %vm551, %v573
      %s575 = sadd.s32 %s180, 2
      %s576 = sld [smem:[#allocation4 + %s575]]
      %v577 = vstv %s576
      %vm578 = vcmp.lt.s32.totalorder %v529, %v577
      %vm579 = vcmp.lt.s32.totalorder %v530, %v577
      %v580 = vsel %vm578, 1, 0
      %v581 = vsel %vm579, 1, 0
      %vm582 = vcmp.eq.s32.totalorder %v580, 1
      %vm583 = vcmp.eq.s32.totalorder %v581, 1
      %v584 = vsel %vm582, %v493, -inf
      %v585 = vsel %vm583, %v496, -inf
      %v586 = vsel %vm213, %v584, -inf
      %v587 = vsel %vm213, %v585, -inf
      %v588 = vmax.f32 %v586, %v587
      %v589 = vrot.slane %v588, 4
      %v590 = vmax.f32 %v588, %v589
      %v591 = vrot.slane %v590, 2
      %v592 = vmax.f32 %v590, %v591
      %v593 = vrot.slane %v592, 1
      %v594 = vmax.f32 %v592, %v593
      %v595 = vmax.f32 %v594, 0.0
      %596 = vst.msk [vmem:[%s179 + $0x2] sm:$0x1] %vm551, %v595
      %s597 = sadd.s32 %s180, 3
      %s598 = sld [smem:[#allocation4 + %s597]]
      %v599 = vstv %s598
      %vm600 = vcmp.lt.s32.totalorder %v529, %v599
      %vm601 = vcmp.lt.s32.totalorder %v530, %v599
      %v602 = vsel %vm600, 1, 0
      %v603 = vsel %vm601, 1, 0
      %vm604 = vcmp.eq.s32.totalorder %v602, 1
      %vm605 = vcmp.eq.s32.totalorder %v603, 1
      %v606 = vsel %vm604, %v499, -inf
      %v607 = vsel %vm605, %v502, -inf
      %v608 = vsel %vm213, %v606, -inf
      %v609 = vsel %vm213, %v607, -inf
      %v610 = vmax.f32 %v608, %v609
      %v611 = vrot.slane %v610, 4
      %v612 = vmax.f32 %v610, %v611
      %v613 = vrot.slane %v612, 2
      %v614 = vmax.f32 %v612, %v613
      %v615 = vrot.slane %v614, 1
      %v616 = vmax.f32 %v614, %v615
      %v617 = vmax.f32 %v616, 0.0
      %618 = vst.msk [vmem:[%s179 + $0x3] sm:$0x1] %vm551, %v617
      %s619 = sadd.s32 %s180, 4
      %s620 = sld [smem:[#allocation4 + %s619]]
      %v621 = vstv %s620
      %vm622 = vcmp.lt.s32.totalorder %v529, %v621
      %vm623 = vcmp.lt.s32.totalorder %v530, %v621
      %v624 = vsel %vm622, 1, 0
      %v625 = vsel %vm623, 1, 0
      %vm626 = vcmp.eq.s32.totalorder %v624, 1
      %vm627 = vcmp.eq.s32.totalorder %v625, 1
      %v628 = vsel %vm626, %v505, -inf
      %v629 = vsel %vm627, %v508, -inf
      %v630 = vsel %vm213, %v628, -inf
      %v631 = vsel %vm213, %v629, -inf
      %v632 = vmax.f32 %v630, %v631
      %v633 = vrot.slane %v632, 4
      %v634 = vmax.f32 %v632, %v633
      %v635 = vrot.slane %v634, 2
      %v636 = vmax.f32 %v634, %v635
      %v637 = vrot.slane %v636, 1
      %v638 = vmax.f32 %v636, %v637
      %v639 = vmax.f32 %v638, 0.0
      %640 = vst.msk [vmem:[%s179 + $0x4] sm:$0x1] %vm551, %v639
      %s641 = sadd.s32 %s180, 5
      %s642 = sld [smem:[#allocation4 + %s641]]
      %v643 = vstv %s642
      %vm644 = vcmp.lt.s32.totalorder %v529, %v643
      %vm645 = vcmp.lt.s32.totalorder %v530, %v643
      %v646 = vsel %vm644, 1, 0
      %v647 = vsel %vm645, 1, 0
      %vm648 = vcmp.eq.s32.totalorder %v646, 1
      %vm649 = vcmp.eq.s32.totalorder %v647, 1
      %v650 = vsel %vm648, %v511, -inf
      %v651 = vsel %vm649, %v514, -inf
      %v652 = vsel %vm213, %v650, -inf
      %v653 = vsel %vm213, %v651, -inf
      %v654 = vmax.f32 %v652, %v653
      %v655 = vrot.slane %v654, 4
      %v656 = vmax.f32 %v654, %v655
      %v657 = vrot.slane %v656, 2
      %v658 = vmax.f32 %v656, %v657
      %v659 = vrot.slane %v658, 1
      %v660 = vmax.f32 %v658, %v659
      %v661 = vmax.f32 %v660, 0.0
      %662 = vst.msk [vmem:[%s179 + $0x5] sm:$0x1] %vm551, %v661
      %s663 = sadd.s32 %s180, 6
      %s664 = sld [smem:[#allocation4 + %s663]]
      %v665 = vstv %s664
      %vm666 = vcmp.lt.s32.totalorder %v529, %v665
      %vm667 = vcmp.lt.s32.totalorder %v530, %v665
      %v668 = vsel %vm666, 1, 0
      %v669 = vsel %vm667, 1, 0
      %vm670 = vcmp.eq.s32.totalorder %v668, 1
      %vm671 = vcmp.eq.s32.totalorder %v669, 1
      %v672 = vsel %vm670, %v517, -inf
      %v673 = vsel %vm671, %v520, -inf
      %v674 = vsel %vm213, %v672, -inf
      %v675 = vsel %vm213, %v673, -inf
      %v676 = vmax.f32 %v674, %v675
      %v677 = vrot.slane %v676, 4
      %v678 = vmax.f32 %v676, %v677
      %v679 = vrot.slane %v678, 2
      %v680 = vmax.f32 %v678, %v679
      %v681 = vrot.slane %v680, 1
      %v682 = vmax.f32 %v680, %v681
      %v683 = vmax.f32 %v682, 0.0
      %684 = vst.msk [vmem:[%s179 + $0x6] sm:$0x1] %vm551, %v683
      %s685 = sadd.s32 %s180, 7
      %s686 = sld [smem:[#allocation4 + %s685]]
      %v687 = vstv %s686
      %vm688 = vcmp.lt.s32.totalorder %v529, %v687
      %vm689 = vcmp.lt.s32.totalorder %v530, %v687
      %v690 = vsel %vm688, 1, 0
      %v691 = vsel %vm689, 1, 0
      %vm692 = vcmp.eq.s32.totalorder %v690, 1
      %vm693 = vcmp.eq.s32.totalorder %v691, 1
      %v694 = vsel %vm692, %v523, -inf
      %v695 = vsel %vm693, %v526, -inf
      %v696 = vsel %vm213, %v694, -inf
      %v697 = vsel %vm213, %v695, -inf
      %v698 = vmax.f32 %v696, %v697
      %v699 = vrot.slane %v698, 4
      %v700 = vmax.f32 %v698, %v699
      %v701 = vrot.slane %v700, 2
      %v702 = vmax.f32 %v700, %v701
      %v703 = vrot.slane %v702, 1
      %v704 = vmax.f32 %v702, %v703
      %v705 = vmax.f32 %v704, 0.0
      %706 = vst.msk [vmem:[%s179 + $0x7] sm:$0x1] %vm551, %v705
      %p707 = scmp.lt.s32.totalorder %s23, 1
      %s708 = scalar_select %p707, %s23, 1
      %s709 = smul.addr %s708, 8
      %s710 = scalar_lea.vmem %s4, %s709
      // Predicated region
      $region33: #{one_edge_model_forward.2} parent=31 // pred_check
        %p711 = pneg %p109
      $region34: #{one_edge_model_forward.2} parent=31 // pred_check_branch
        %713 = sbr.rel (%p711) target = $region36
      $region35: #{one_edge_model_forward.2} parent=31 // pred_region
        _
      $region36: #{one_edge_model_forward.2} parent=31 // pred_fallthru
        _
    $region32: #{one_edge_model_forward.2} parent=5 // pred_fallthru
      _
    %p714 = scmp.le.s32.totalorder 2, %s18
    // Predicated region
    $region37: #{one_edge_model_forward.2} parent=5 // pred_check
      %p715 = pneg %p714
    $region38: #{one_edge_model_forward.2} parent=5 // pred_check_branch
      %717 = sbr.rel (%p715) target = $region40
    $region39: #{one_edge_model_forward.2} parent=5 // pred_region
      %s718 = ssub.s32 %s18, 2
      // Predicated region
      $region41: #{one_edge_model_forward.2} parent=39 // pred_check
        %p719 = pneg %p115
      $region42: #{one_edge_model_forward.2} parent=39 // pred_check_branch
        %721 = sbr.rel (%p719) target = $region44
      $region43: #{one_edge_model_forward.2} parent=39 // pred_region
        %p722 = scmp.lt.s32.totalorder %s24, 1
        %s723 = scalar_select %p722, %s24, 1
        %s724 = smul.addr %s723, 8
        %s725 = scalar_lea.vmem %s4, %s724
      $region44: #{one_edge_model_forward.2} parent=39 // pred_fallthru
        _
    $region40: #{one_edge_model_forward.2} parent=5 // pred_fallthru
      _
  $region6: #{one_edge_model_forward.2} parent=0 // loop_footer
    %s22 = sadd.s32 1, %s18
  $region7: #{one_edge_model_forward.2} parent=0 // loop_footer_branch
    %17 = sbr.rel target = $region3
  $region8: #{one_edge_model_forward.2} parent=0 // loop_exit
    _

</llo_original>
